<compile_context>
chip_gen: v6e
topology: v6e:2x2x1
jax: 0.10.0
libtpu: 0.0.40
codegen_flags: <defaults>
</compile_context>

<pallas_src>
import math

import jax
import jax.numpy as jnp
from jax.experimental import pallas as pl
from jax.experimental.pallas import tpu as pltpu

_LANES = 128
_MIN_SPLIT_BYTES = 1 * 1024 * 1024  # min bytes per step after a forced TC split


def _chip_config():
    """Per-generation tuning: (target_block_bytes, vmem_limit_bytes, n_tensorcores)."""
    kind = ""
    try:
        kind = jax.devices()[0].device_kind.lower()
    except Exception:  # pragma: no cover - defensive; default is the safe config
        pass
    if "v7" in kind:
        # v7x: 64 MiB physical VMEM -> conservative 32 MiB scoped cap; 4 MiB
        # blocks (3 streams x 2 buffers x 4 MiB = 24 MiB); 2 TensorCores/chip.
        return 4 * 1024 * 1024, 32 * 1024 * 1024, 2
    # v5e / v6e (and default): 128 MiB physical VMEM, single TensorCore.
    return 8 * 1024 * 1024, 64 * 1024 * 1024, 1


_TARGET_BLOCK_BYTES, _VMEM_LIMIT_BYTES, _NUM_TC = _chip_config()


def _sub_mult(dtype) -> int:
    """Dtype-native sublane multiple: 8 for 4B, 16 for 2B, 32 for 1B types."""
    return max(8, 32 // jnp.dtype(dtype).itemsize)


def _round_up(x: int, m: int) -> int:
    return ((x + m - 1) // m) * m


def _compiler_params(n_grid_dims: int):
    return pltpu.CompilerParams(
        dimension_semantics=("parallel",) * n_grid_dims,
        vmem_limit_bytes=_VMEM_LIMIT_BYTES,
    )


def _smem_scalar_dtype(dtype):
    """SMEM holds 32-bit scalars: widen sub-4-byte dtypes for the splat operand."""
    dt = jnp.dtype(dtype)
    if dt.itemsize >= 4:
        return dt
    if jnp.issubdtype(dt, jnp.floating):
        return jnp.dtype(jnp.float32)
    if jnp.issubdtype(dt, jnp.unsignedinteger):
        return jnp.dtype(jnp.uint32)
    return jnp.dtype(jnp.int32)


def _maybe_tc_split(n_units, block_units, unit_mult, unit_bytes):
    """If the grid would collapse to a single step on a multi-TC chip and the
    tensor is big enough, split into >=4 steps (>=2 per TensorCore) so both
    cores stream with DMA/compute overlap. No-op on v5e/v6e or small tensors."""
    if _NUM_TC < 2 or block_units < n_units or n_units < 4 * unit_mult:
        return block_units
    if n_units * unit_bytes < 4 * _MIN_SPLIT_BYTES:
        return block_units
    return _round_up(pl.cdiv(n_units, 4), unit_mult)


# ------------------------------ kernels --------------------------------------

def _mul_kernel(a_ref, b_ref, o_ref):
    # VPU elementwise multiply; dtype promotion/cast in-register. The small
    # operand ((1, m, 1) scale or (1, inner) row vector) broadcasts in-register.
    o_ref[...] = (a_ref[...] * b_ref[...]).astype(o_ref.dtype)


def _mul_scalar_kernel(a_ref, s_ref, o_ref):
    # Scalar lives in SMEM; splat from an sreg instead of a VMEM stream.
    o_ref[...] = (a_ref[...] * s_ref[0, 0]).astype(o_ref.dtype)


# ------------------------------ drivers ---------------------------------------

def _mul_flat(a, b, out_shape, out_dtype, b_is_scalar):
    """a * b where b has a's shape, or b is a scalar (SMEM splat)."""
    n = a.size
    max_isz = max(jnp.dtype(a.dtype).itemsize, jnp.dtype(out_dtype).itemsize,
                  4 if b_is_scalar else jnp.dtype(b.dtype).itemsize)
    sub = max(_sub_mult(a.dtype), _sub_mult(out_dtype),
              8 if b_is_scalar else _sub_mult(b.dtype))

    if b_is_scalar:
        kernel = _mul_scalar_kernel
        b_arg = b.reshape(1, 1).astype(
            _smem_scalar_dtype(jnp.promote_types(a.dtype, b.dtype)))
        b_spec = pl.BlockSpec(memory_space=pltpu.MemorySpace.SMEM)
    else:
        kernel = _mul_kernel
        b_arg = None
        b_spec = None

    if n % _LANES == 0:
        # Lane-aligned fast path: lane-dense (rows, 128) view, no padding.
        rows = n // _LANES
        row_bytes = _LANES * max_isz
        target_rows = max(sub, (_TARGET_BLOCK_BYTES // row_bytes // sub) * sub)
        block_rows = rows if rows <= target_rows else target_rows
        block_rows = _maybe_tc_split(rows, block_rows, sub, row_bytes)
        grid = (pl.cdiv(rows, block_rows),)

        a2 = a.reshape(rows, _LANES)
        a_spec = pl.BlockSpec((block_rows, _LANES), lambda i: (i, 0))
        if not b_is_scalar:
            b_arg = b.reshape(rows, _LANES)
            b_spec = a_spec
        out2 = pl.pallas_call(
            kernel,
            out_shape=jax.ShapeDtypeStruct((rows, _LANES), out_dtype),
            grid=grid,
            in_specs=[a_spec, b_spec],
            out_specs=pl.BlockSpec((block_rows, _LANES), lambda i: (i, 0)),
            compiler_params=_compiler_params(1),
        )(a2, b_arg)
        return out2.reshape(out_shape)

    # Ragged element count: keep the array 1-D, blocks are multiples of
    # (sublane * 128) and Pallas masks the boundary block itself -> no extra
    # HBM passes for pad / slice.
    unit = sub * _LANES
    target_elems = max(unit, (_TARGET_BLOCK_BYTES // max_isz // unit) * unit)
    block_elems = n if n <= target_elems else target_elems
    block_elems = _maybe_tc_split(n, block_elems, unit, max_isz)
    grid = (pl.cdiv(n, block_elems),)

    af = a.reshape(n)
    a_spec = pl.BlockSpec((block_elems,), lambda i: (i,))
    if not b_is_scalar:
        b_arg = b.reshape(n)
        b_spec = a_spec
    out1 = pl.pallas_call(
        kernel,
        out_shape=jax.ShapeDtypeStruct((n,), out_dtype),
        grid=grid,
        in_specs=[a_spec, b_spec],
        out_specs=pl.BlockSpec((block_elems,), lambda i: (i,)),
        compiler_params=_compiler_params(1),
    )(af, b_arg)
    return out1.reshape(out_shape)


def _mul_channel3d(big, small, pre, mid, post, out_shape, out_dtype):
    """big (pre, mid, post) * small (mid,), post >= 128 (lane-dense blocks).
    The small operand stays a tiny (1, tile_mid, 1) VMEM block — no broadcast."""
    big3 = big.reshape(pre, mid, post)
    small3 = small.reshape(1, mid, 1)

    max_isz = max(jnp.dtype(big.dtype).itemsize, jnp.dtype(small.dtype).itemsize,
                  jnp.dtype(out_dtype).itemsize)
    budget = max(8 * _LANES, _TARGET_BLOCK_BYTES // max_isz)  # elems per big block
    sub = max(_sub_mult(big.dtype), _sub_mult(small.dtype), _sub_mult(out_dtype))

    # Lane dim first, then mid, then fold as many leading `pre` slices as fit —
    # MiB-scale DMAs for small C*H*W, grid steps amortized over pre.
    tile_post = post if post <= budget else max(_LANES, (budget // _LANES) * _LANES)
    max_mid = max(1, budget // tile_post)
    tile_mid = mid if mid <= max_mid else max(sub, (max_mid // sub) * sub)
    max_pre = max(1, budget // (tile_mid * tile_post))
    tile_pre = min(pre, max_pre)

    grid = (pl.cdiv(pre, tile_pre), pl.cdiv(mid, tile_mid), pl.cdiv(post, tile_post))

    # v7x: make sure some parallel axis has >=2 blocks when the whole tensor
    # would otherwise be a single grid step (keep both TensorCores streaming).
    if (_NUM_TC >= 2 and grid == (1, 1, 1)
            and pre * mid * post * max_isz >= 4 * _MIN_SPLIT_BYTES):
        if pre >= 2:
            tile_pre = pl.cdiv(pre, 2)
        elif mid >= 2 * sub:
            tile_mid = _round_up(pl.cdiv(mid, 2), sub)
        elif post >= 2 * _LANES:
            tile_post = _round_up(pl.cdiv(post, 2), _LANES)
        grid = (pl.cdiv(pre, tile_pre), pl.cdiv(mid, tile_mid),
                pl.cdiv(post, tile_post))

    big_spec = pl.BlockSpec((tile_pre, tile_mid, tile_post), lambda i, j, k: (i, j, k))
    small_spec = pl.BlockSpec((1, tile_mid, 1), lambda i, j, k: (0, j, 0))
    out_spec = pl.BlockSpec((tile_pre, tile_mid, tile_post), lambda i, j, k: (i, j, k))

    out3 = pl.pallas_call(
        _mul_kernel,
        out_shape=jax.ShapeDtypeStruct((pre, mid, post), out_dtype),
        grid=grid,
        in_specs=[big_spec, small_spec],
        out_specs=out_spec,
        compiler_params=_compiler_params(3),
    )(big3, small3)
    return out3.reshape(out_shape)


def _mul_rowvec(big, small_vec, pre, inner, out_shape, out_dtype):
    """big viewed as (pre, inner) times one (1, inner) row vector broadcast
    across rows in-register. Used when the trailing broadcast extent is < 128
    lanes: keeps the output lane-dense (no masked partial stores)."""
    big2 = big.reshape(pre, inner)
    small2 = small_vec.reshape(1, inner)

    max_isz = max(jnp.dtype(big.dtype).itemsize, jnp.dtype(small_vec.dtype).itemsize,
                  jnp.dtype(out_dtype).itemsize)
    budget = max(8 * _LANES, _TARGET_BLOCK_BYTES // max_isz)
    sub = max(_sub_mult(big.dtype), _sub_mult(small_vec.dtype), _sub_mult(out_dtype))

    tile_inner = inner if inner <= budget else max(_LANES, (budget // _LANES) * _LANES)
    max_pre = max(1, budget // tile_inner)
    tile_pre = pre if pre <= max_pre else max(sub, (max_pre // sub) * sub)

    grid = (pl.cdiv(pre, tile_pre), pl.cdiv(inner, tile_inner))
    if (_NUM_TC >= 2 and grid == (1, 1)
            and pre * inner * max_isz >= 4 * _MIN_SPLIT_BYTES):
        if pre >= 2 * sub:
            tile_pre = _round_up(pl.cdiv(pre, 2), sub)
        elif inner >= 2 * _LANES:
            tile_inner = _round_up(pl.cdiv(inner, 2), _LANES)
        grid = (pl.cdiv(pre, tile_pre), pl.cdiv(inner, tile_inner))

    big_spec = pl.BlockSpec((tile_pre, tile_inner), lambda i, j: (i, j))
    small_spec = pl.BlockSpec((1, tile_inner), lambda i, j: (0, j))
    out_spec = pl.BlockSpec((tile_pre, tile_inner), lambda i, j: (i, j))

    out2 = pl.pallas_call(
        _mul_kernel,
        out_shape=jax.ShapeDtypeStruct((pre, inner), out_dtype),
        grid=grid,
        in_specs=[big_spec, small_spec],
        out_specs=out_spec,
        compiler_params=_compiler_params(2),
    )(big2, small2)
    return out2.reshape(out_shape)


@jax.jit
def pallas_mul(x1: jax.Array, x2: jax.Array) -> jax.Array:
    """torch.mul(x1, x2) equivalent: broadcasted elementwise multiply."""
    out_shape = tuple(jnp.broadcast_shapes(x1.shape, x2.shape))
    out_dtype = jnp.promote_types(x1.dtype, x2.dtype)
    n = math.prod(out_shape)
    if n == 0:
        return jnp.zeros(out_shape, out_dtype)

    # Same shape: plain lane-dense streaming multiply.
    if tuple(x1.shape) == tuple(x2.shape):
        return _mul_flat(x1, x2, out_shape, out_dtype, b_is_scalar=False)

    # One operand already has the full output shape (the common QAT case).
    if tuple(x1.shape) == out_shape:
        big, small = x1, x2
    elif tuple(x2.shape) == out_shape:
        big, small = x2, x1
    else:
        # TODO(synk): rare two-sided broadcast (neither operand has the output
        # shape) — correctness fallback with materialized broadcasts.
        return _mul_flat(jnp.broadcast_to(x1, out_shape),
                         jnp.broadcast_to(x2, out_shape),
                         out_shape, out_dtype, b_is_scalar=False)

    # Scalar operand: SMEM splat inside the kernel.
    if small.size == 1:
        return _mul_flat(big, small, out_shape, out_dtype, b_is_scalar=True)

    # Channel-style broadcast (e.g. x * (1,C,1,1) scale): view big as
    # (pre, mid, post) and keep the small operand tiny in VMEM.
    rank = len(out_shape)
    s_aligned = (1,) * (rank - small.ndim) + tuple(small.shape)
    non1 = [d for d in range(rank) if s_aligned[d] != 1]
    lo, hi = non1[0], non1[-1]
    if (hi - lo + 1) == len(non1):
        pre = math.prod(out_shape[:lo]) if lo > 0 else 1
        mid = math.prod(out_shape[lo:hi + 1])
        post = math.prod(out_shape[hi + 1:]) if hi + 1 < rank else 1
        if post >= _LANES:
            return _mul_channel3d(big, small, pre, mid, post, out_shape, out_dtype)
        # post < 128: avoid lane-sparse partial stores — broadcast the tiny
        # small operand to (mid*post,) (a few KB) and run a lane-dense
        # row-vector multiply on big viewed as (pre, mid*post).
        small_vec = jnp.broadcast_to(small.reshape(mid, 1), (mid, post))
        return _mul_rowvec(big, small_vec, pre, mid * post, out_shape, out_dtype)

    # TODO(synk): non-contiguous broadcast pattern (e.g. (C,1,W)) — correctness
    # fallback with one materialized broadcast of the small operand.
    return _mul_flat(big, jnp.broadcast_to(small, out_shape), out_shape, out_dtype,
                     b_is_scalar=False)


if __name__ == "__main__":
    key = jax.random.PRNGKey(0)
    k1, k2, k3, k4, k5 = jax.random.split(key, 5)

    # Small NCHW-style tensors (same convention as PyTorch inputs).
    x1 = jax.random.normal(k1, (2, 4, 16, 16), dtype=jnp.float32)
    x2 = jax.random.normal(k2, (2, 4, 16, 16), dtype=jnp.float32)

    out = pallas_mul(x1, x2)
    jax.block_until_ready(out)
    ref = x1 * x2
    assert out.shape == ref.shape, (out.shape, ref.shape)
    assert out.dtype == ref.dtype, (out.dtype, ref.dtype)
    assert jnp.allclose(out, ref, atol=1e-6, rtol=1e-6)

    # Channel-wise scale broadcast (QAT-style x * (1,C,1,1) scale), post >= 128.
    scale = jax.random.normal(k3, (1, 4, 1, 1), dtype=jnp.float32)
    out_b = pallas_mul(x1, scale)
    jax.block_until_ready(out_b)
    assert jnp.allclose(out_b, x1 * scale, atol=1e-6, rtol=1e-6)

    # Channel-wise scale with small spatial extent (post < 128 -> row-vector path).
    y = jax.random.normal(k4, (2, 8, 4, 4), dtype=jnp.float32)
    scale_s = jax.random.normal(k5, (1, 8, 1, 1), dtype=jnp.float32)
    out_rv = pallas_mul(y, scale_s)
    jax.block_until_ready(out_rv)
    assert jnp.allclose(out_rv, y * scale_s, atol=1e-6, rtol=1e-6)

    # 0-d scalar operand (SMEM splat).
    s = jnp.float32(1.7)
    out_s = pallas_mul(x1, s)
    jax.block_until_ready(out_s)
    assert jnp.allclose(out_s, x1 * s, atol=1e-6, rtol=1e-6)

    # Ragged element count (not a multiple of 128) -> un-padded 1-D path.
    r1 = jax.random.normal(k1, (3, 5, 7), dtype=jnp.float32)
    r2 = jax.random.normal(k2, (3, 5, 7), dtype=jnp.float32)
    out_r = pallas_mul(r1, r2)
    jax.block_until_ready(out_r)
    assert jnp.allclose(out_r, r1 * r2, atol=1e-6, rtol=1e-6)

    print("KERNEL_OK")
</pallas_src>

<mosaic_0001>
module attributes {stable_mosaic.version = 11 : i64} {
  func.func @_mul_kernel(%arg0: i32, %arg1: memref<16x128xf32, #tpu.memory_space<vmem>>, %arg2: memref<16x128xf32, #tpu.memory_space<vmem>>, %arg3: memref<16x128xf32, #tpu.memory_space<vmem>>) attributes {dimension_semantics = [#tpu.dimension_semantics<parallel>], iteration_bounds = array<i64: 1>, scalar_prefetch = 0 : i64, scratch_operands = 0 : i64, tpu.core_type = #tpu.core_type<tc>, window_params = [{transform_indices = @transform_0, window_bounds = array<i64: 16, 128>}, {transform_indices = @transform_1, window_bounds = array<i64: 16, 128>}, {transform_indices = @transform_2, window_bounds = array<i64: 16, 128>}]} {
    %c0 = arith.constant 0 : index
    %c0_0 = arith.constant 0 : index
    %0 = vector.load %arg1[%c0, %c0_0] : memref<16x128xf32, #tpu.memory_space<vmem>>, vector<16x128xf32>
    %c0_1 = arith.constant 0 : index
    %c0_2 = arith.constant 0 : index
    %1 = vector.load %arg2[%c0_1, %c0_2] : memref<16x128xf32, #tpu.memory_space<vmem>>, vector<16x128xf32>
    %2 = arith.mulf %0, %1 : vector<16x128xf32>
    %c0_3 = arith.constant 0 : index
    %c0_4 = arith.constant 0 : index
    %3 = vector.load %arg3[%c0_3, %c0_4] : memref<16x128xf32, #tpu.memory_space<vmem>>, vector<16x128xf32>
    tpu.vector_store %arg3[%c0_3, %c0_4], %2 {strides = array<i32>} : memref<16x128xf32, #tpu.memory_space<vmem>>, vector<16x128xf32>,
    return
  }
  func.func @transform_0(%arg0: i32) -> (i32, i32) {
    %c0_i32 = arith.constant 0 : i32
    %c0_i32_0 = arith.constant 0 : i32
    return %arg0, %c0_i32 : i32, i32
  }
  func.func @transform_1(%arg0: i32) -> (i32, i32) {
    %c0_i32 = arith.constant 0 : i32
    %c0_i32_0 = arith.constant 0 : i32
    return %arg0, %c0_i32 : i32, i32
  }
  func.func @transform_2(%arg0: i32) -> (i32, i32) {
    %c0_i32 = arith.constant 0 : i32
    %c0_i32_0 = arith.constant 0 : i32
    return %arg0, %c0_i32 : i32, i32
  }
}

</mosaic_0001>

<llo_original>
// kernel: pallas_mul.1
$region0: #{pallas_mul.1}
  #allocation0 [shape = 'u32[]', space=smem, size = 0x4, offset = 0x4, fixed_abs, tag = 'smem constant byte address 0x4 - core index']
  #allocation1 [shape = 'u32[144,128]{1,0:T(1,128)}', space=vmem, size = 0x12000, scoped, tag = 'internal scratch']
  %s0 = inlined_call_operand.vmem [shape: f32[16,128], index: 0, kind: input, shape index: {}]
  %s1 = inlined_call_operand.vmem [shape: f32[16,128], index: 1, kind: input, shape index: {}]
  %s2 = inlined_call_operand.vmem [shape: f32[16,128], index: 2, kind: output, shape index: {}]
  %s3 = sld [smem:[#allocation0]]
  $region18: #{pallas_mul.1} parent=0
    _
  %s5 = ssub.s32 1, %s3
  %s6 = scalar_select 0, %s5, %s3
  // Predicated region
  $region2: #{pallas_mul.1} parent=0 // pred_check
    _
  $region3: #{pallas_mul.1} parent=0 // pred_check_branch
    %8 = sbr.rel (0) target = $region5
  $region4: #{pallas_mul.1} parent=0 // pred_region
    _
  $region5: #{pallas_mul.1} parent=0 // pred_fallthru
    _
  // Predicated region
  $region6: #{pallas_mul.1} parent=0 // pred_check
    _
  $region7: #{pallas_mul.1} parent=0 // pred_check_branch
    %10 = sbr.rel (0) target = $region9
  $region8: #{pallas_mul.1} parent=0 // pred_region
    _
  $region9: #{pallas_mul.1} parent=0 // pred_fallthru
    _
  %v11 = vld [vmem:[%s0] sm:$0xff]
  %v12 = vld [vmem:[%s0 + $0x8] sm:$0xff]
  %v13 = vld [vmem:[%s1] sm:$0xff]
  %v14 = vld [vmem:[%s1 + $0x8] sm:$0xff]
  %v15 = vmul.f32 %v11, %v13
  %v16 = vmul.f32 %v12, %v14
  %17 = vst [vmem:[%s2] sm:$0xff] %v15
  %18 = vst [vmem:[%s2 + $0x8] sm:$0xff] %v16
  // Predicated region
  $region10: #{pallas_mul.1} parent=0 // pred_check
    _
  $region11: #{pallas_mul.1} parent=0 // pred_check_branch
    %20 = sbr.rel (0) target = $region13
  $region12: #{pallas_mul.1} parent=0 // pred_region
    _
  $region13: #{pallas_mul.1} parent=0 // pred_fallthru
    _
  // Predicated region
  $region14: #{pallas_mul.1} parent=0 // pred_check
    _
  $region15: #{pallas_mul.1} parent=0 // pred_check_branch
    %22 = sbr.rel (0) target = $region17
  $region16: #{pallas_mul.1} parent=0 // pred_region
    _
  $region17: #{pallas_mul.1} parent=0 // pred_fallthru
    _

</llo_original>
